<compile_context>
chip_gen: v5e
topology: v5e:2x2
jax: 0.10.0
libtpu: 0.0.40
codegen_flags: <defaults>
</compile_context>

<pallas_src>
import math

import jax
import jax.numpy as jnp
from jax.experimental import pallas as pl
from jax.experimental.pallas import tpu as pltpu


def _round_up(x, m):
    return ((x + m - 1) // m) * m


def gated_residual_conv_forward(x, weight, bias, alpha, *, pad=None, tile_m=512,
                                out_dtype=None):
    """GatedResidual wrapping Convolution(insize -> size, winlen, stride=1) + tanh.

    x:      [T, B, C] float32 (time, batch, features)
    weight: [S, C, winlen]  (torch Conv1d layout); S == C required for the residual
    bias:   [S]
    alpha:  [1]  gate parameter; gate = sigmoid(alpha)
    returns [T, B, S] = gate * x + (1 - gate) * tanh(conv1d(x) + bias)
    """
    T, B, C = x.shape
    S, Cw, winlen = weight.shape
    assert Cw == C
    assert S == C, "GatedResidual requires the sublayer to preserve the feature size"
    if pad is None:
        pad = (winlen // 2, (winlen - 1) // 2)
    T_out = T + pad[0] + pad[1] - winlen + 1
    assert T_out == T, "GatedResidual requires the sublayer to preserve the time length"
    if out_dtype is None:
        out_dtype = x.dtype
    pad0 = int(pad[0])

    # Rows = flattened (time, batch): row m = t*B + b.  With time-major flattening, the
    # winlen taps of output row m are input rows m + w*B, so one contiguous window of
    # TM + (winlen-1)*B rows per tile covers every tap, and the residual is tap pad0.
    M = T_out * B
    HALO = (winlen - 1) * B
    TM = max(int(tile_m), 2 * HALO)       # bound halo re-read overhead at <= 50%
    TM = _round_up(TM, 16)                # bf16 packs 2 rows per sublane
    TM = min(TM, _round_up(M, 16))        # small problems: single tile
    Mp = _round_up(M, TM)
    grid = (Mp // TM,)

    # --- wrapper glue (one pass over x): flatten, cast bf16, time-pad, round row count ---
    x_rows = jnp.pad(x.reshape(M, C).astype(jnp.bfloat16),
                     ((pad0 * B, pad[1] * B + (Mp - M)), (0, 0)))      # (Mp + HALO, C)
    wf = jnp.transpose(weight, (2, 1, 0)).astype(jnp.bfloat16)         # (winlen, C, S)
    bf = bias.reshape(1, S).astype(jnp.float32)
    gate = jax.nn.sigmoid(alpha.reshape(1).astype(jnp.float32))        # scalar gate

    def kernel(gate_ref, x_hbm, w_ref, b_ref, o_ref, xwin, acc_ref, sem):
        # One M-tile per grid step: DMA the row window (tile + halo) from HBM, run the
        # winlen accumulating MXU dots, then fuse bias + tanh + gated residual.
        i = pl.program_id(0)
        row0 = pl.multiple_of(i * TM, TM)
        cp = pltpu.make_async_copy(x_hbm.at[pl.ds(row0, TM + HALO)], xwin, sem.at[0])
        cp.start()
        cp.wait()

        acc_ref[...] = jnp.dot(xwin[pl.ds(0, TM), :], w_ref[0],
                               preferred_element_type=jnp.float32)
        for w in range(1, winlen):                       # unrolled: winlen is a small constant
            acc_ref[...] += jnp.dot(xwin[pl.ds(w * B, TM), :], w_ref[w],
                                    preferred_element_type=jnp.float32)

        y = jnp.tanh(acc_ref[...] + b_ref[...])          # sublayer: conv + bias + tanh (f32)
        g = gate_ref[0]                                  # scalar gate from SMEM
        xres = xwin[pl.ds(pad0 * B, TM), :].astype(jnp.float32)   # centre tap == residual x
        o_ref[...] = (g * xres + (1.0 - g) * y).astype(o_ref.dtype)

    out_bytes = jnp.dtype(out_dtype).itemsize
    # Explicit VMEM budget: x window + f32 acc + (pipeline-buffered) weight/bias/output block.
    vmem_needed = ((TM + HALO) * C * 2 + TM * S * 4
                   + 2 * winlen * C * S * 2 + 2 * S * 4 + 2 * TM * S * out_bytes)
    vmem_limit = int(min(96 * 2**20, max(16 * 2**20, 2 * vmem_needed)))

    out = pl.pallas_call(
        kernel,
        out_shape=jax.ShapeDtypeStruct((Mp, S), out_dtype),
        grid=grid,
        in_specs=[
            pl.BlockSpec(memory_space=pltpu.MemorySpace.SMEM),     # gate scalar
            pl.BlockSpec(memory_space=pl.ANY),                     # x rows: raw HBM, manual DMA
            pl.BlockSpec((winlen, C, S), lambda i: (0, 0, 0)),     # per-tap weights (resident)
            pl.BlockSpec((1, S), lambda i: (0, 0)),                # bias (resident)
        ],
        out_specs=pl.BlockSpec((TM, S), lambda i: (i, 0)),
        scratch_shapes=[
            pltpu.VMEM((TM + HALO, C), jnp.bfloat16),              # x window (tile + halo)
            pltpu.VMEM((TM, S), jnp.float32),                      # conv accumulator
            pltpu.SemaphoreType.DMA((1,)),
        ],
        compiler_params=pltpu.CompilerParams(
            dimension_semantics=("parallel",),
            vmem_limit_bytes=vmem_limit),
        cost_estimate=pl.CostEstimate(
            flops=int(2 * Mp * winlen * C * S),
            transcendentals=int(Mp * S),
            bytes_accessed=int((Mp + HALO) * C * 2 + winlen * C * S * 2 + S * 4
                               + Mp * S * out_bytes)),
    )(gate, x_rows, wf, bf)

    # Drop the padded tail rows and restore [T, B, S].
    return out[:M].reshape(T_out, B, S)


def _reference(x, weight, bias, alpha, pad):
    """Pure-JAX reference of GatedResidual(conv+tanh).  The conv operands and the residual
    read are rounded to bf16 exactly as the kernel feeds them (accumulation stays f32)."""
    T, B, C = x.shape
    S, _, winlen = weight.shape
    x_pad = jnp.pad(x, ((pad[0], pad[1]), (0, 0), (0, 0)))
    xq = x_pad.astype(jnp.bfloat16).astype(jnp.float32)
    wq = jnp.transpose(weight, (2, 1, 0)).astype(jnp.bfloat16).astype(jnp.float32)
    y = jnp.broadcast_to(bias[None, None, :].astype(jnp.float32), (T, B, S))
    for w in range(winlen):
        y = y + jnp.einsum('tbc,cs->tbs', xq[w:w + T], wq[w])
    y = jnp.tanh(y)
    gate = jax.nn.sigmoid(alpha[0])
    xres = x.astype(jnp.bfloat16).astype(jnp.float32)      # kernel residual path is bf16
    return gate * xres + (1.0 - gate) * y


if __name__ == "__main__":
    # Small deterministic config: GatedResidual(Convolution(insize=size, winlen, stride=1)).
    T, B = 16, 2
    insize = size = 8                 # residual needs output features == input features
    winlen, stride = 5, 1
    pad = (winlen // 2, (winlen - 1) // 2)
    gate_init = 0.0                   # module default -> gate = 0.5

    key = jax.random.PRNGKey(0)
    kw, kb, kx = jax.random.split(key, 3)

    # Deterministic synthetic params following Convolution.reset_parameters():
    fanin = insize * winlen
    fanout = size * winlen / stride
    weight = (0.5 * jax.random.truncated_normal(
        kw, -2.0, 2.0, (size, insize, winlen), jnp.float32)
        / math.sqrt(fanin + fanout))
    bias = 0.5 * jax.random.truncated_normal(kb, -2.0, 2.0, (size,), jnp.float32)
    alpha = jnp.array([gate_init], jnp.float32)

    x = jax.random.normal(kx, (T, B, insize), jnp.float32)        # [time, batch, features]

    out = gated_residual_conv_forward(x, weight, bias, alpha, pad=pad)
    out = jax.block_until_ready(out)

    ref = _reference(x, weight, bias, alpha, pad)
    assert out.shape == (T, B, size), out.shape
    err = float(jnp.max(jnp.abs(out - ref)))
    assert jnp.allclose(out, ref, atol=2e-4, rtol=2e-4), err

    print("KERNEL_OK")
</pallas_src>

<mosaic_0001>
module attributes {stable_mosaic.version = 11 : i64} {
  func.func @kernel(%arg0: i32, %arg1: memref<1xf32, #tpu.memory_space<smem>>, %arg2: memref<40x8xbf16, #tpu.memory_space<any>>, %arg3: memref<5x8x8xbf16, #tpu.memory_space<vmem>>, %arg4: memref<1x8xf32, #tpu.memory_space<vmem>>, %arg5: memref<32x8xf32, #tpu.memory_space<vmem>>, %arg6: memref<40x8xbf16, #tpu.memory_space<vmem>>, %arg7: memref<32x8xf32, #tpu.memory_space<vmem>>, %arg8: memref<1x!tpu.dma_semaphore, #tpu.memory_space<semaphore_mem>>) attributes {dimension_semantics = [#tpu.dimension_semantics<parallel>], iteration_bounds = array<i64: 1>, scalar_prefetch = 0 : i64, scratch_operands = 3 : i64, tpu.core_type = #tpu.core_type<tc>, window_params = [{transform_indices = @transform_0, window_bounds = array<i64: 1>}, {}, {pipeline_mode = #tpu.pipeline_mode<synchronous>, transform_indices = @transform_2, window_bounds = array<i64: 5, 8, 8>}, {pipeline_mode = #tpu.pipeline_mode<synchronous>, transform_indices = @transform_3, window_bounds = array<i64: 1, 8>}, {transform_indices = @transform_4, window_bounds = array<i64: 32, 8>}]} {
    %c32_i32 = arith.constant 32 : i32
    %0 = arith.muli %arg0, %c32_i32 : i32
    %1 = tpu.assume_multiple %0, 32 : i32
    %c0_i32 = arith.constant 0 : i32
    %c0_i32_0 = arith.constant 0 : i32
    %2 = tpu.memref_slice %arg2[%1, %c0_i32_0] : memref<40x8xbf16, #tpu.memory_space<any>> -> memref<40x8xbf16, #tpu.memory_space<any>>
    %3 = tpu.memref_slice %arg8[%c0_i32] : memref<1x!tpu.dma_semaphore, #tpu.memory_space<semaphore_mem>> -> memref<1x!tpu.dma_semaphore, #tpu.memory_space<semaphore_mem>>
    %4 = tpu.memref_squeeze %3 : memref<1x!tpu.dma_semaphore, #tpu.memory_space<semaphore_mem>> -> memref<!tpu.dma_semaphore, #tpu.memory_space<semaphore_mem>>
    tpu.enqueue_dma source(%2 : memref<40x8xbf16, #tpu.memory_space<any>>) target(%arg6 : memref<40x8xbf16, #tpu.memory_space<vmem>>) target_semaphore(%4 : memref<!tpu.dma_semaphore, #tpu.memory_space<semaphore_mem>>)
    %c0_i32_1 = arith.constant 0 : i32
    %c0_i32_2 = arith.constant 0 : i32
    %5 = tpu.memref_slice %arg2[%1, %c0_i32_2] : memref<40x8xbf16, #tpu.memory_space<any>> -> memref<40x8xbf16, #tpu.memory_space<any>>
    %6 = tpu.memref_slice %arg8[%c0_i32_1] : memref<1x!tpu.dma_semaphore, #tpu.memory_space<semaphore_mem>> -> memref<1x!tpu.dma_semaphore, #tpu.memory_space<semaphore_mem>>
    %7 = tpu.memref_squeeze %6 : memref<1x!tpu.dma_semaphore, #tpu.memory_space<semaphore_mem>> -> memref<!tpu.dma_semaphore, #tpu.memory_space<semaphore_mem>>
    tpu.wait_dma2 semaphore(%7 : memref<!tpu.dma_semaphore, #tpu.memory_space<semaphore_mem>>) src(%5 : memref<40x8xbf16, #tpu.memory_space<any>>) dst(%arg6 : memref<40x8xbf16, #tpu.memory_space<vmem>>)
    %c0 = arith.constant 0 : index
    %c0_3 = arith.constant 0 : index
    %8 = vector.load %arg6[%c0, %c0_3] : memref<40x8xbf16, #tpu.memory_space<vmem>>, vector<32x8xbf16>
    %c0_4 = arith.constant 0 : index
    %c0_5 = arith.constant 0 : index
    %c0_6 = arith.constant 0 : index
    %9 = vector.load %arg3[%c0_4, %c0_5, %c0_6] : memref<5x8x8xbf16, #tpu.memory_space<vmem>>, vector<1x8x8xbf16>
    %10 = vector.shape_cast %9 : vector<1x8x8xbf16> to vector<8x8xbf16>
    %cst = arith.constant dense<0.000000e+00> : vector<32x8xf32>
    %11 = tpu.matmul %8, %10, %cst {dimension_numbers = #tpu.dot_dimension_numbers<[1], [0], [0], [1], [0, 0, 1, 1], [], []>} : vector<32x8xbf16>, vector<8x8xbf16>, vector<32x8xf32> -> vector<32x8xf32>
    %c0_7 = arith.constant 0 : index
    %c0_8 = arith.constant 0 : index
    %12 = vector.load %arg7[%c0_7, %c0_8] : memref<32x8xf32, #tpu.memory_space<vmem>>, vector<32x8xf32>
    tpu.vector_store %arg7[%c0_7, %c0_8], %11 {strides = array<i32>} : memref<32x8xf32, #tpu.memory_space<vmem>>, vector<32x8xf32>,
    %c0_9 = arith.constant 0 : index
    %c0_10 = arith.constant 0 : index
    %13 = vector.load %arg7[%c0_9, %c0_10] : memref<32x8xf32, #tpu.memory_space<vmem>>, vector<32x8xf32>
    %c2 = arith.constant 2 : index
    %c0_11 = arith.constant 0 : index
    %14 = vector.load %arg6[%c2, %c0_11] : memref<40x8xbf16, #tpu.memory_space<vmem>>, vector<32x8xbf16>
    %c1 = arith.constant 1 : index
    %c0_12 = arith.constant 0 : index
    %c0_13 = arith.constant 0 : index
    %15 = vector.load %arg3[%c1, %c0_12, %c0_13] : memref<5x8x8xbf16, #tpu.memory_space<vmem>>, vector<1x8x8xbf16>
    %16 = vector.shape_cast %15 : vector<1x8x8xbf16> to vector<8x8xbf16>
    %cst_14 = arith.constant dense<0.000000e+00> : vector<32x8xf32>
    %17 = tpu.matmul %14, %16, %cst_14 {dimension_numbers = #tpu.dot_dimension_numbers<[1], [0], [0], [1], [0, 0, 1, 1], [], []>} : vector<32x8xbf16>, vector<8x8xbf16>, vector<32x8xf32> -> vector<32x8xf32>
    %18 = arith.addf %13, %17 : vector<32x8xf32>
    %c0_15 = arith.constant 0 : index
    %c0_16 = arith.constant 0 : index
    %19 = vector.load %arg7[%c0_15, %c0_16] : memref<32x8xf32, #tpu.memory_space<vmem>>, vector<32x8xf32>
    tpu.vector_store %arg7[%c0_15, %c0_16], %18 {strides = array<i32>} : memref<32x8xf32, #tpu.memory_space<vmem>>, vector<32x8xf32>,
    %c0_17 = arith.constant 0 : index
    %c0_18 = arith.constant 0 : index
    %20 = vector.load %arg7[%c0_17, %c0_18] : memref<32x8xf32, #tpu.memory_space<vmem>>, vector<32x8xf32>
    %c4 = arith.constant 4 : index
    %c0_19 = arith.constant 0 : index
    %21 = vector.load %arg6[%c4, %c0_19] : memref<40x8xbf16, #tpu.memory_space<vmem>>, vector<32x8xbf16>
    %c2_20 = arith.constant 2 : index
    %c0_21 = arith.constant 0 : index
    %c0_22 = arith.constant 0 : index
    %22 = vector.load %arg3[%c2_20, %c0_21, %c0_22] : memref<5x8x8xbf16, #tpu.memory_space<vmem>>, vector<1x8x8xbf16>
    %23 = vector.shape_cast %22 : vector<1x8x8xbf16> to vector<8x8xbf16>
    %cst_23 = arith.constant dense<0.000000e+00> : vector<32x8xf32>
    %24 = tpu.matmul %21, %23, %cst_23 {dimension_numbers = #tpu.dot_dimension_numbers<[1], [0], [0], [1], [0, 0, 1, 1], [], []>} : vector<32x8xbf16>, vector<8x8xbf16>, vector<32x8xf32> -> vector<32x8xf32>
    %25 = arith.addf %20, %24 : vector<32x8xf32>
    %c0_24 = arith.constant 0 : index
    %c0_25 = arith.constant 0 : index
    %26 = vector.load %arg7[%c0_24, %c0_25] : memref<32x8xf32, #tpu.memory_space<vmem>>, vector<32x8xf32>
    tpu.vector_store %arg7[%c0_24, %c0_25], %25 {strides = array<i32>} : memref<32x8xf32, #tpu.memory_space<vmem>>, vector<32x8xf32>,
    %c0_26 = arith.constant 0 : index
    %c0_27 = arith.constant 0 : index
    %27 = vector.load %arg7[%c0_26, %c0_27] : memref<32x8xf32, #tpu.memory_space<vmem>>, vector<32x8xf32>
    %c6 = arith.constant 6 : index
    %c0_28 = arith.constant 0 : index
    %28 = vector.load %arg6[%c6, %c0_28] : memref<40x8xbf16, #tpu.memory_space<vmem>>, vector<32x8xbf16>
    %c3 = arith.constant 3 : index
    %c0_29 = arith.constant 0 : index
    %c0_30 = arith.constant 0 : index
    %29 = vector.load %arg3[%c3, %c0_29, %c0_30] : memref<5x8x8xbf16, #tpu.memory_space<vmem>>, vector<1x8x8xbf16>
    %30 = vector.shape_cast %29 : vector<1x8x8xbf16> to vector<8x8xbf16>
    %cst_31 = arith.constant dense<0.000000e+00> : vector<32x8xf32>
    %31 = tpu.matmul %28, %30, %cst_31 {dimension_numbers = #tpu.dot_dimension_numbers<[1], [0], [0], [1], [0, 0, 1, 1], [], []>} : vector<32x8xbf16>, vector<8x8xbf16>, vector<32x8xf32> -> vector<32x8xf32>
    %32 = arith.addf %27, %31 : vector<32x8xf32>
    %c0_32 = arith.constant 0 : index
    %c0_33 = arith.constant 0 : index
    %33 = vector.load %arg7[%c0_32, %c0_33] : memref<32x8xf32, #tpu.memory_space<vmem>>, vector<32x8xf32>
    tpu.vector_store %arg7[%c0_32, %c0_33], %32 {strides = array<i32>} : memref<32x8xf32, #tpu.memory_space<vmem>>, vector<32x8xf32>,
    %c0_34 = arith.constant 0 : index
    %c0_35 = arith.constant 0 : index
    %34 = vector.load %arg7[%c0_34, %c0_35] : memref<32x8xf32, #tpu.memory_space<vmem>>, vector<32x8xf32>
    %c8 = arith.constant 8 : index
    %c0_36 = arith.constant 0 : index
    %35 = vector.load %arg6[%c8, %c0_36] : memref<40x8xbf16, #tpu.memory_space<vmem>>, vector<32x8xbf16>
    %c4_37 = arith.constant 4 : index
    %c0_38 = arith.constant 0 : index
    %c0_39 = arith.constant 0 : index
    %36 = vector.load %arg3[%c4_37, %c0_38, %c0_39] : memref<5x8x8xbf16, #tpu.memory_space<vmem>>, vector<1x8x8xbf16>
    %37 = vector.shape_cast %36 : vector<1x8x8xbf16> to vector<8x8xbf16>
    %cst_40 = arith.constant dense<0.000000e+00> : vector<32x8xf32>
    %38 = tpu.matmul %35, %37, %cst_40 {dimension_numbers = #tpu.dot_dimension_numbers<[1], [0], [0], [1], [0, 0, 1, 1], [], []>} : vector<32x8xbf16>, vector<8x8xbf16>, vector<32x8xf32> -> vector<32x8xf32>
    %39 = arith.addf %34, %38 : vector<32x8xf32>
    %c0_41 = arith.constant 0 : index
    %c0_42 = arith.constant 0 : index
    %40 = vector.load %arg7[%c0_41, %c0_42] : memref<32x8xf32, #tpu.memory_space<vmem>>, vector<32x8xf32>
    tpu.vector_store %arg7[%c0_41, %c0_42], %39 {strides = array<i32>} : memref<32x8xf32, #tpu.memory_space<vmem>>, vector<32x8xf32>,
    %c0_43 = arith.constant 0 : index
    %c0_44 = arith.constant 0 : index
    %41 = vector.load %arg7[%c0_43, %c0_44] : memref<32x8xf32, #tpu.memory_space<vmem>>, vector<32x8xf32>
    %c0_45 = arith.constant 0 : index
    %c0_46 = arith.constant 0 : index
    %42 = vector.load %arg4[%c0_45, %c0_46] : memref<1x8xf32, #tpu.memory_space<vmem>>, vector<1x8xf32>
    %43 = vector.broadcast %42 : vector<1x8xf32> to vector<32x8xf32>
    %44 = arith.addf %41, %43 : vector<32x8xf32>
    %45 = math.tanh %44 : vector<32x8xf32>
    %c0_47 = arith.constant 0 : index
    %46 = memref.load %arg1[%c0_47] : memref<1xf32, #tpu.memory_space<smem>>
    %c4_48 = arith.constant 4 : index
    %c0_49 = arith.constant 0 : index
    %47 = vector.load %arg6[%c4_48, %c0_49] : memref<40x8xbf16, #tpu.memory_space<vmem>>, vector<32x8xbf16>
    %48 = arith.extf %47 : vector<32x8xbf16> to vector<32x8xf32>
    %49 = vector.broadcast %46 : f32 to vector<32x8xf32>
    %50 = arith.mulf %49, %48 : vector<32x8xf32>
    %cst_50 = arith.constant 1.000000e+00 : f32
    %51 = arith.subf %cst_50, %46 : f32
    %52 = vector.broadcast %51 : f32 to vector<32x8xf32>
    %53 = arith.mulf %52, %45 : vector<32x8xf32>
    %54 = arith.addf %50, %53 : vector<32x8xf32>
    %c0_51 = arith.constant 0 : index
    %c0_52 = arith.constant 0 : index
    %55 = vector.load %arg5[%c0_51, %c0_52] : memref<32x8xf32, #tpu.memory_space<vmem>>, vector<32x8xf32>
    tpu.vector_store %arg5[%c0_51, %c0_52], %54 {strides = array<i32>} : memref<32x8xf32, #tpu.memory_space<vmem>>, vector<32x8xf32>,
    return
  }
  func.func @transform_0(%arg0: i32) -> i32 {
    %c0_i32 = arith.constant 0 : i32
    %c0_i32_0 = arith.constant 0 : i32
    return %c0_i32 : i32
  }
  func.func @transform_2(%arg0: i32) -> (i32, i32, i32) {
    %c0_i32 = arith.constant 0 : i32
    %c0_i32_0 = arith.constant 0 : i32
    %c0_i32_1 = arith.constant 0 : i32
    %c0_i32_2 = arith.constant 0 : i32
    return %c0_i32, %c0_i32_0, %c0_i32_1 : i32, i32, i32
  }
  func.func @transform_3(%arg0: i32) -> (i32, i32) {
    %c0_i32 = arith.constant 0 : i32
    %c0_i32_0 = arith.constant 0 : i32
    %c0_i32_1 = arith.constant 0 : i32
    return %c0_i32, %c0_i32_0 : i32, i32
  }
  func.func @transform_4(%arg0: i32) -> (i32, i32) {
    %c0_i32 = arith.constant 0 : i32
    %c0_i32_0 = arith.constant 0 : i32
    return %arg0, %c0_i32 : i32, i32
  }
}

</mosaic_0001>

<llo_original>
// kernel: tpu_custom_call.1
$region0: #{tpu_custom_call.1}
  #allocation0 [shape = 'u32[]', space=smem, size = 0x4, offset = 0x4, fixed_abs, tag = 'smem constant byte address 0x4 - core index']
  #allocation1 [shape = 'u32[72,128]{1,0:T(1,128)}', space=vmem, size = 0x9000, scoped, tag = 'internal scratch']
  #allocation2 [shape = 'bf16[40,8]{1,0:T(8,128)(2,1)}', space=vmem, size = 0x2800, scoped, tag = 'scratch operand']
  #allocation3 [shape = 'f32[32,8]{1,0:T(8,128)}', space=vmem, size = 0x4000, scoped, tag = 'scratch operand']
  #allocation4 [shape = 's32[1]{0}', space=sflag, size = 0x4, scoped, tag = 'scratch operand']
  #allocation5 [shape = 'f32[1]{0:T(128)S(6)}', space=smem, size = 0x200, scoped, tag = 'scoped memory for tpu_custom_call.1']
  #allocation6 [shape = 's32[]', space=sflag, size = 0x4, offset = 0, fixed_abs, tag = 'sflag constant byte address 0x0 - dummy sync flag']
  %s0 = inlined_call_operand.<no memory space> [shape: f32[1], index: 0, kind: input, shape index: {}]
  %s1 = inlined_call_operand.vmem [shape: bf16[40,8], index: 1, kind: input, shape index: {}]
  %s2 = inlined_call_operand.vmem [shape: bf16[5,8,8], index: 2, kind: input, shape index: {}]
  %s3 = inlined_call_operand.vmem [shape: f32[1,8], index: 3, kind: input, shape index: {}]
  %s4 = inlined_call_operand.vmem [shape: f32[32,8], index: 4, kind: output, shape index: {}]
  %s5 = sld [smem:[#allocation0]]
  $region44: #{tpu_custom_call.1} parent=0
    _
  %s7 = ssub.s32 1, %s5
  %s8 = scalar_select 0, %s7, %s5
  %9 = sst [smem:[#allocation5]] %s0
  // Predicated region
  $region2: #{tpu_custom_call.1} parent=0 // pred_check
    _
  $region3: #{tpu_custom_call.1} parent=0 // pred_check_branch
    %11 = sbr.rel (0) target = $region5
  $region4: #{tpu_custom_call.1} parent=0 // pred_region
    _
  $region5: #{tpu_custom_call.1} parent=0 // pred_fallthru
    _
  // Predicated region
  $region6: #{tpu_custom_call.1} parent=0 // pred_check
    _
  $region7: #{tpu_custom_call.1} parent=0 // pred_check_branch
    %13 = sbr.rel (0) target = $region9
  $region8: #{tpu_custom_call.1} parent=0 // pred_region
    _
  $region9: #{tpu_custom_call.1} parent=0 // pred_fallthru
    _
  // Predicated region
  $region10: #{tpu_custom_call.1} parent=0 // pred_check
    _
  $region11: #{tpu_custom_call.1} parent=0 // pred_check_branch
    %15 = sbr.rel (0) target = $region13
  $region12: #{tpu_custom_call.1} parent=0 // pred_region
    _
  $region13: #{tpu_custom_call.1} parent=0 // pred_fallthru
    _
  %s17 = smul.u32 0, 32
  %s18 = sshra.s32 %s17, 3
  %s19 = sand.u32 %s17, 7
  %s20 = smul.addr %s18, 4
  %s21 = scalar_lea.vmem %s1, %s20
  // Predicated region
  $region14: #{tpu_custom_call.1} parent=0 // pred_check
    _
  $region15: #{tpu_custom_call.1} parent=0 // pred_check_branch
    %23 = sbr.rel (0) target = $region17
  $region16: #{tpu_custom_call.1} parent=0 // pred_region
    %s24 = scalar_lea.vmem %s21, 16
    %s25 = scalar_lea.vmem [#allocation2], 16
    loop: start=0, step=1, limit=1
    $region18: #{tpu_custom_call.1} parent=16 // loop_pre_header
      _
    $region19: #{tpu_custom_call.1} parent=16 // loop_header
      %s27 = sphi 0, %s31
      %p28 = scmp.ge.s32.totalorder %s27, 1
      %s32 = sphi %s21, %s21
      %s33 = sphi [#allocation2], [#allocation2]
    $region20: #{tpu_custom_call.1} parent=16 // loop_header_branch
      %30 = sbr.rel (%p28) target = $region24
    $region21: #{tpu_custom_call.1} parent=16 // loop_body
      %v34 = vld [vmem:[%s32] sm:$0xff]
      %35 = vst [vmem:[%s33] sm:$0xff] %v34
      %v36 = vld [vmem:[%s32 + $0x8] sm:$0xff]
      %37 = vst [vmem:[%s33 + $0x8] sm:$0xff] %v36
    $region22: #{tpu_custom_call.1} parent=16 // loop_footer
      %s31 = sadd.s32 1, %s27
    $region23: #{tpu_custom_call.1} parent=16 // loop_footer_branch
      %26 = sbr.rel target = $region19
    $region24: #{tpu_custom_call.1} parent=16 // loop_exit
      _
    %s39 = ssub.s32 16, 1
    loop: start=0, step=1, limit=1
    $region25: #{tpu_custom_call.1} parent=16 // loop_pre_header
      _
    $region26: #{tpu_custom_call.1} parent=16 // loop_header
      %s41 = sphi 0, %s45
      %p42 = scmp.ge.s32.totalorder %s41, 1
      %s46 = sphi %s24, %s24
      %s47 = sphi %s25, %s25
    $region27: #{tpu_custom_call.1} parent=16 // loop_header_branch
      %44 = sbr.rel (%p42) target = $region31
    $region28: #{tpu_custom_call.1} parent=16 // loop_body
      %v48 = vld [vmem:[%s46] sm:%s39]
      %49 = vst [vmem:[%s47] sm:%s39] %v48
    $region29: #{tpu_custom_call.1} parent=16 // loop_footer
      %s45 = sadd.s32 1, %s41
    $region30: #{tpu_custom_call.1} parent=16 // loop_footer_branch
      %40 = sbr.rel target = $region26
    $region31: #{tpu_custom_call.1} parent=16 // loop_exit
      _
  $region17: #{tpu_custom_call.1} parent=0 // pred_fallthru
    _
  // Predicated region
  $region32: #{tpu_custom_call.1} parent=0 // pred_check
    _
  $region33: #{tpu_custom_call.1} parent=0 // pred_check_branch
    %52 = sbr.rel (0) target = $region35
  $region34: #{tpu_custom_call.1} parent=0 // pred_region
    %53 = vsyncadd [#allocation4], 320
  $region35: #{tpu_custom_call.1} parent=0 // pred_fallthru
    _
  %s54 = smul.u32 4, 5
  %s55 = smul.u32 %s54, 1
  %s56 = sshll.u32 %s55, 4
  %57 = dma.done [#allocation4], %s56
  %v58 = vld [vmem:[#allocation2] sm:$0xf]
  %v59 = vld [vmem:[#allocation2 + $0x4] sm:$0xf]
  %v60 = vld [vmem:[#allocation2 + $0x8] sm:$0xf]
  %v61 = vld [vmem:[#allocation2 + $0xc] sm:$0xf]
  %v62 = vld [vmem:[%s2] sm:$0xf]
  %v67 = vunpack.c.l.b16 %v58
  %v68 = vunpack.c.l.b16 %v59
  %v69 = vunpack.c.l.b16 %v60
  %v70 = vunpack.c.l.b16 %v61
  %v71 = vpack.c.b16 %v68, %v67
  %v72 = vpack.c.b16 %v70, %v69
  %vm73 = vcmask 64512
  %v75 = vsel %vm73, %v71, 0
  %v78 = vsel %vm73, %v72, 0
  %vm80 = vcmask 1043456
  %v82 = vsel %vm80, %v62, 0
  %84 = vmatpush.bf16.msra.mxu0 0
  %85 = vmatpush.bf16.msra.mxu0 0
  %86 = vmatpush.bf16.msra.mxu0 0
  %87 = vmatpush.bf16.msra.mxu0 0
  %88 = vmatpush.bf16.msra.mxu0 0
  %89 = vmatpush.bf16.msra.mxu0 0
  %90 = vmatpush.bf16.msra.mxu0 0
  %91 = vmatpush.bf16.msra.mxu0 %v82
  %92 = vmatmul.bf16.gmra.mxu0 %v75
  %v93 = vpop.f32.mrf.mxu0
  %v94 = vadd.f32 0.0, %v93
  %v95 = vpop.f32.mrf.mxu0
  %v96 = vadd.f32 0.0, %v95
  %97 = vmatmul.bf16.gmra.mxu0 %v78
  %v98 = vpop.f32.mrf.mxu0
  %v99 = vadd.f32 0.0, %v98
  %v100 = vpop.f32.mrf.mxu0
  %v101 = vadd.f32 0.0, %v100
  %102 = vdwg.mxu0
  %103 = vst.msk [vmem:[#allocation3] sm:$0xff] %vm73, %v94
  %104 = vst.msk [vmem:[#allocation3 + $0x8] sm:$0xff] %vm73, %v96
  %105 = vst.msk [vmem:[#allocation3 + $0x10] sm:$0xff] %vm73, %v99
  %106 = vst.msk [vmem:[#allocation3 + $0x18] sm:$0xff] %vm73, %v101
  %v107 = vld [vmem:[#allocation3] sm:$0xff]
  %v108 = vld [vmem:[#allocation3 + $0x8] sm:$0xff]
  %v109 = vld [vmem:[#allocation3 + $0x10] sm:$0xff]
  %v110 = vld [vmem:[#allocation3 + $0x18] sm:$0xff]
  %v111 = vld [vmem:[#allocation2] sm:$0xe]
  %v112 = vld [vmem:[#allocation2 + $0x4] sm:$0xf]
  %v113 = vld [vmem:[#allocation2 + $0x8] sm:$0xf]
  %v114 = vld [vmem:[#allocation2 + $0xc] sm:$0xf]
  %v115 = vld [vmem:[#allocation2 + $0x10] sm:$0x1]
  %s116 = scalar_lea.vmem %s2, 4
  %v117 = vld [vmem:[%s116] sm:$0xf]
  %v123 = vunpack.c.l.b16 %v111
  %v124 = vunpack.c.l.b16 %v112
  %v125 = vunpack.c.l.b16 %v113
  %v126 = vunpack.c.l.b16 %v114
  %v127 = vunpack.c.l.b16 %v115
  %v128 = vpack.c.b16 %v124, %v123
  %v129 = vpack.c.b16 %v126, %v125
  %v130 = vpack.c.b16 %v127, %v127
  %vm131 = vcmask 1046528
  %v132 = vrot.slane %v128, 1
  %v133 = vrot.slane %v129, 1
  %v134 = vsel %vm131, %v132, %v133
  %v135 = vrot.slane %v130, 1
  %v136 = vsel %vm131, %v133, %v135
  %v138 = vsel %vm73, %v134, 0
  %v141 = vsel %vm73, %v136, 0
  %v144 = vsel %vm80, %v117, 0
  %146 = vmatpush.bf16.msra.mxu0 0
  %147 = vmatpush.bf16.msra.mxu0 0
  %148 = vmatpush.bf16.msra.mxu0 0
  %149 = vmatpush.bf16.msra.mxu0 0
  %150 = vmatpush.bf16.msra.mxu0 0
  %151 = vmatpush.bf16.msra.mxu0 0
  %152 = vmatpush.bf16.msra.mxu0 0
  %153 = vmatpush.bf16.msra.mxu0 %v144
  %154 = vmatmul.bf16.gmra.mxu0 %v138
  %v155 = vpop.f32.mrf.mxu0
  %v156 = vadd.f32 0.0, %v155
  %v157 = vpop.f32.mrf.mxu0
  %v158 = vadd.f32 0.0, %v157
  %159 = vmatmul.bf16.gmra.mxu0 %v141
  %v160 = vpop.f32.mrf.mxu0
  %v161 = vadd.f32 0.0, %v160
  %v162 = vpop.f32.mrf.mxu0
  %v163 = vadd.f32 0.0, %v162
  %164 = vdwg.mxu0
  %v165 = vadd.f32 %v107, %v156
  %v166 = vadd.f32 %v108, %v158
  %v167 = vadd.f32 %v109, %v161
  %v168 = vadd.f32 %v110, %v163
  %169 = vst.msk [vmem:[#allocation3] sm:$0xff] %vm73, %v165
  %170 = vst.msk [vmem:[#allocation3 + $0x8] sm:$0xff] %vm73, %v166
  %171 = vst.msk [vmem:[#allocation3 + $0x10] sm:$0xff] %vm73, %v167
  %172 = vst.msk [vmem:[#allocation3 + $0x18] sm:$0xff] %vm73, %v168
  %v173 = vld [vmem:[#allocation3] sm:$0xff]
  %v174 = vld [vmem:[#allocation3 + $0x8] sm:$0xff]
  %v175 = vld [vmem:[#allocation3 + $0x10] sm:$0xff]
  %v176 = vld [vmem:[#allocation3 + $0x18] sm:$0xff]
  %v177 = vld [vmem:[#allocation2] sm:$0xc]
  %v178 = vld [vmem:[#allocation2 + $0x4] sm:$0xf]
  %v179 = vld [vmem:[#allocation2 + $0x8] sm:$0xf]
  %v180 = vld [vmem:[#allocation2 + $0xc] sm:$0xf]
  %v181 = vld [vmem:[#allocation2 + $0x10] sm:$0x3]
  %s182 = scalar_lea.vmem %s2, 8
  %v183 = vld [vmem:[%s182] sm:$0xf]
  %v189 = vunpack.c.l.b16 %v177
  %v190 = vunpack.c.l.b16 %v178
  %v191 = vunpack.c.l.b16 %v179
  %v192 = vunpack.c.l.b16 %v180
  %v193 = vunpack.c.l.b16 %v181
  %v194 = vpack.c.b16 %v190, %v189
  %v195 = vpack.c.b16 %v192, %v191
  %v196 = vpack.c.b16 %v193, %v193
  %vm197 = vcmask 1045504
  %v198 = vrot.slane %v194, 2
  %v199 = vrot.slane %v195, 2
  %v200 = vsel %vm197, %v198, %v199
  %v201 = vrot.slane %v196, 2
  %v202 = vsel %vm197, %v199, %v201
  %v204 = vsel %vm73, %v200, 0
  %v207 = vsel %vm73, %v202, 0
  %v210 = vsel %vm80, %v183, 0
  %212 = vmatpush.bf16.msra.mxu0 0
  %213 = vmatpush.bf16.msra.mxu0 0
  %214 = vmatpush.bf16.msra.mxu0 0
  %215 = vmatpush.bf16.msra.mxu0 0
  %216 = vmatpush.bf16.msra.mxu0 0
  %217 = vmatpush.bf16.msra.mxu0 0
  %218 = vmatpush.bf16.msra.mxu0 0
  %219 = vmatpush.bf16.msra.mxu0 %v210
  %220 = vmatmul.bf16.gmra.mxu0 %v204
  %v221 = vpop.f32.mrf.mxu0
  %v222 = vadd.f32 0.0, %v221
  %v223 = vpop.f32.mrf.mxu0
  %v224 = vadd.f32 0.0, %v223
  %225 = vmatmul.bf16.gmra.mxu0 %v207
  %v226 = vpop.f32.mrf.mxu0
  %v227 = vadd.f32 0.0, %v226
  %v228 = vpop.f32.mrf.mxu0
  %v229 = vadd.f32 0.0, %v228
  %230 = vdwg.mxu0
  %v231 = vadd.f32 %v173, %v222
  %v232 = vadd.f32 %v174, %v224
  %v233 = vadd.f32 %v175, %v227
  %v234 = vadd.f32 %v176, %v229
  %235 = vst.msk [vmem:[#allocation3] sm:$0xff] %vm73, %v231
  %236 = vst.msk [vmem:[#allocation3 + $0x8] sm:$0xff] %vm73, %v232
  %237 = vst.msk [vmem:[#allocation3 + $0x10] sm:$0xff] %vm73, %v233
  %238 = vst.msk [vmem:[#allocation3 + $0x18] sm:$0xff] %vm73, %v234
  %v239 = vld [vmem:[#allocation3] sm:$0xff]
  %v240 = vld [vmem:[#allocation3 + $0x8] sm:$0xff]
  %v241 = vld [vmem:[#allocation3 + $0x10] sm:$0xff]
  %v242 = vld [vmem:[#allocation3 + $0x18] sm:$0xff]
  %v243 = vld [vmem:[#allocation2] sm:$0x8]
  %v244 = vld [vmem:[#allocation2 + $0x4] sm:$0xf]
  %v245 = vld [vmem:[#allocation2 + $0x8] sm:$0xf]
  %v246 = vld [vmem:[#allocation2 + $0xc] sm:$0xf]
  %v247 = vld [vmem:[#allocation2 + $0x10] sm:$0x7]
  %s248 = scalar_lea.vmem %s2, 12
  %v249 = vld [vmem:[%s248] sm:$0xf]
  %v255 = vunpack.c.l.b16 %v243
  %v256 = vunpack.c.l.b16 %v244
  %v257 = vunpack.c.l.b16 %v245
  %v258 = vunpack.c.l.b16 %v246
  %v259 = vunpack.c.l.b16 %v247
  %v260 = vpack.c.b16 %v256, %v255
  %v261 = vpack.c.b16 %v258, %v257
  %v262 = vpack.c.b16 %v259, %v259
  %vm263 = vcmask 1044480
  %v264 = vrot.slane %v260, 3
  %v265 = vrot.slane %v261, 3
  %v266 = vsel %vm263, %v264, %v265
  %v267 = vrot.slane %v262, 3
  %v268 = vsel %vm263, %v265, %v267
  %v270 = vsel %vm73, %v266, 0
  %v273 = vsel %vm73, %v268, 0
  %v276 = vsel %vm80, %v249, 0
  %278 = vmatpush.bf16.msra.mxu0 0
  %279 = vmatpush.bf16.msra.mxu0 0
  %280 = vmatpush.bf16.msra.mxu0 0
  %281 = vmatpush.bf16.msra.mxu0 0
  %282 = vmatpush.bf16.msra.mxu0 0
  %283 = vmatpush.bf16.msra.mxu0 0
  %284 = vmatpush.bf16.msra.mxu0 0
  %285 = vmatpush.bf16.msra.mxu0 %v276
  %286 = vmatmul.bf16.gmra.mxu0 %v270
  %v287 = vpop.f32.mrf.mxu0
  %v288 = vadd.f32 0.0, %v287
  %v289 = vpop.f32.mrf.mxu0
  %v290 = vadd.f32 0.0, %v289
  %291 = vmatmul.bf16.gmra.mxu0 %v273
  %v292 = vpop.f32.mrf.mxu0
  %v293 = vadd.f32 0.0, %v292
  %v294 = vpop.f32.mrf.mxu0
  %v295 = vadd.f32 0.0, %v294
  %296 = vdwg.mxu0
  %v297 = vadd.f32 %v239, %v288
  %v298 = vadd.f32 %v240, %v290
  %v299 = vadd.f32 %v241, %v293
  %v300 = vadd.f32 %v242, %v295
  %301 = vst.msk [vmem:[#allocation3] sm:$0xff] %vm73, %v297
  %302 = vst.msk [vmem:[#allocation3 + $0x8] sm:$0xff] %vm73, %v298
  %303 = vst.msk [vmem:[#allocation3 + $0x10] sm:$0xff] %vm73, %v299
  %304 = vst.msk [vmem:[#allocation3 + $0x18] sm:$0xff] %vm73, %v300
  %v305 = vld [vmem:[#allocation3] sm:$0xff]
  %v306 = vld [vmem:[#allocation3 + $0x8] sm:$0xff]
  %v307 = vld [vmem:[#allocation3 + $0x10] sm:$0xff]
  %v308 = vld [vmem:[#allocation3 + $0x18] sm:$0xff]
  %v309 = vld [vmem:[#allocation2 + $0x4] sm:$0xf]
  %v310 = vld [vmem:[#allocation2 + $0x8] sm:$0xf]
  %v311 = vld [vmem:[#allocation2 + $0xc] sm:$0xf]
  %v312 = vld [vmem:[#allocation2 + $0x10] sm:$0xf]
  %s313 = scalar_lea.vmem %s2, 16
  %v314 = vld [vmem:[%s313] sm:$0xf]
  %v319 = vunpack.c.l.b16 %v309
  %v320 = vunpack.c.l.b16 %v310
  %v321 = vunpack.c.l.b16 %v311
  %v322 = vunpack.c.l.b16 %v312
  %v323 = vpack.c.b16 %v320, %v319
  %v324 = vpack.c.b16 %v322, %v321
  %v326 = vsel %vm73, %v323, 0
  %v329 = vsel %vm73, %v324, 0
  %v332 = vsel %vm80, %v314, 0
  %334 = vmatpush.bf16.msra.mxu0 0
  %335 = vmatpush.bf16.msra.mxu0 0
  %336 = vmatpush.bf16.msra.mxu0 0
  %337 = vmatpush.bf16.msra.mxu0 0
  %338 = vmatpush.bf16.msra.mxu0 0
  %339 = vmatpush.bf16.msra.mxu0 0
  %340 = vmatpush.bf16.msra.mxu0 0
  %341 = vmatpush.bf16.msra.mxu0 %v332
  %342 = vmatmul.bf16.gmra.mxu0 %v326
  %v343 = vpop.f32.mrf.mxu0
  %v344 = vadd.f32 0.0, %v343
  %v345 = vpop.f32.mrf.mxu0
  %v346 = vadd.f32 0.0, %v345
  %347 = vmatmul.bf16.gmra.mxu0 %v329
  %v348 = vpop.f32.mrf.mxu0
  %v349 = vadd.f32 0.0, %v348
  %v350 = vpop.f32.mrf.mxu0
  %v351 = vadd.f32 0.0, %v350
  %352 = vdwg.mxu0
  %v353 = vadd.f32 %v305, %v344
  %v354 = vadd.f32 %v306, %v346
  %v355 = vadd.f32 %v307, %v349
  %v356 = vadd.f32 %v308, %v351
  %357 = vst.msk [vmem:[#allocation3] sm:$0xff] %vm73, %v353
  %358 = vst.msk [vmem:[#allocation3 + $0x8] sm:$0xff] %vm73, %v354
  %359 = vst.msk [vmem:[#allocation3 + $0x10] sm:$0xff] %vm73, %v355
  %360 = vst.msk [vmem:[#allocation3 + $0x18] sm:$0xff] %vm73, %v356
  %v361 = vld [vmem:[#allocation3] sm:$0xff]
  %v362 = vld [vmem:[#allocation3 + $0x8] sm:$0xff]
  %v363 = vld [vmem:[#allocation3 + $0x10] sm:$0xff]
  %v364 = vld [vmem:[#allocation3 + $0x18] sm:$0xff]
  %v365 = vld [vmem:[%s3] sm:$0x1]
  %v367 = vperm.slane %v365, 0
  %v369 = vadd.f32 %v361, %v367
  %v370 = vadd.f32 %v362, %v367
  %v371 = vadd.f32 %v363, %v367
  %v372 = vadd.f32 %v364, %v367
  %v373 = vtanh.pop %v369
  %v374 = vtanh.pop %v370
  %v375 = vtanh.pop %v371
  %v376 = vtanh.pop %v372
  %s377 = sld [smem:[#allocation5]]
  %v378 = vld [vmem:[#allocation2] sm:$0xc]
  %v379 = vld [vmem:[#allocation2 + $0x4] sm:$0xf]
  %v380 = vld [vmem:[#allocation2 + $0x8] sm:$0xf]
  %v381 = vld [vmem:[#allocation2 + $0xc] sm:$0xf]
  %v382 = vld [vmem:[#allocation2 + $0x10] sm:$0x3]
  %v383 = vunpack.c.l.bf16 %v378
  %v384 = vunpack.c.l.bf16 %v379
  %v385 = vunpack.c.l.bf16 %v380
  %v386 = vunpack.c.l.bf16 %v381
  %v387 = vunpack.c.l.bf16 %v382
  %v388 = vstv %s377
  %v389 = vmul.f32 %v388, %v383
  %v390 = vmul.f32 %v388, %v384
  %v391 = vmul.f32 %v388, %v385
  %v392 = vmul.f32 %v388, %v386
  %v393 = vmul.f32 %v388, %v387
  %s394 = ssub.f32 1.0, %s377
  %v395 = vstv %s394
  %v396 = vmul.f32 %v395, %v373
  %v397 = vmul.f32 %v395, %v374
  %v398 = vmul.f32 %v395, %v375
  %v399 = vmul.f32 %v395, %v376
  %v404 = vrot.slane %v396, 4
  %v405 = vrot.slane %v397, 4
  %v406 = vsel %vm80, %v404, %v405
  %v407 = vrot.slane %v398, 4
  %v408 = vsel %vm80, %v405, %v407
  %v409 = vrot.slane %v399, 4
  %v410 = vsel %vm80, %v407, %v409
  %v416 = vadd.f32 %v389, %v404
  %v417 = vadd.f32 %v390, %v406
  %v418 = vadd.f32 %v391, %v408
  %v419 = vadd.f32 %v392, %v410
  %v420 = vadd.f32 %v393, %v409
  %vm421 = vcmask 64516
  %422 = vst.msk [vmem:[%s4 - $0x4] sm:$0xf0] %vm421, %v416
  %423 = vst.msk [vmem:[%s4 + $0x4] sm:$0xff] %vm73, %v417
  %424 = vst.msk [vmem:[%s4 + $0xc] sm:$0xff] %vm73, %v418
  %425 = vst.msk [vmem:[%s4 + $0x14] sm:$0xff] %vm73, %v419
  %vm426 = vcmask 60416
  %427 = vst.msk [vmem:[%s4 + $0x1c] sm:$0xf] %vm426, %v420
  // Predicated region
  $region36: #{tpu_custom_call.1} parent=0 // pred_check
    _
  $region37: #{tpu_custom_call.1} parent=0 // pred_check_branch
    %429 = sbr.rel (0) target = $region39
  $region38: #{tpu_custom_call.1} parent=0 // pred_region
    _
  $region39: #{tpu_custom_call.1} parent=0 // pred_fallthru
    _
  // Predicated region
  $region40: #{tpu_custom_call.1} parent=0 // pred_check
    _
  $region41: #{tpu_custom_call.1} parent=0 // pred_check_branch
    %431 = sbr.rel (0) target = $region43
  $region42: #{tpu_custom_call.1} parent=0 // pred_region
    _
  $region43: #{tpu_custom_call.1} parent=0 // pred_fallthru
    _
  %432 = vsyncmov [#allocation4]
  %s433 = vpop.sfrf %432
  %p434 = scmp.eq.s32.totalorder %s433, 0
  %p435 = pneg %p434
  %437 = shalt.err (%p435)

</llo_original>
